<compile_context>
chip_gen: v6e
topology: v6e:2x2x1
jax: 0.10.0
libtpu: 0.0.40
codegen_flags: <defaults>
</compile_context>

<pallas_src>
import math
import copy
import numpy as np
import jax
import jax.numpy as jnp
from jax.experimental import pallas as pl
from jax.experimental.pallas import tpu as pltpu

# ----- module constants (original hardcodes OUT_H=608//4=152, OUT_W=1088//4=272;
#       we run a small but structurally identical size) -----------------------
OUT_H = 32
OUT_W = 128
HW = OUT_H * OUT_W
MAX_OBJS = 128
NUM_CLASSES = 1
NID = 537
NID_PAD = 640                        # pad #classes to a multiple of 128 lanes
EMB_SCALE = math.sqrt(2) * math.log(NID - 1)
_LOG_LO = math.log(1e-4)             # log of the sigmoid clamp bounds
_LOG_HI = math.log(1.0 - 1e-4)

assert HW % 128 == 0


# =====================================================================
# Host-side numpy target building (mirrors the original forward's numpy code)
# =====================================================================
def gaussian_radius(det_size, min_overlap=0.7):
    height, width = det_size
    a1 = 1
    b1 = height + width
    c1 = width * height * (1 - min_overlap) / (1 + min_overlap)
    sq1 = np.sqrt(b1 ** 2 - 4 * a1 * c1)
    r1 = (b1 + sq1) / 2
    a2 = 4
    b2 = 2 * (height + width)
    c2 = (1 - min_overlap) * width * height
    sq2 = np.sqrt(b2 ** 2 - 4 * a2 * c2)
    r2 = (b2 + sq2) / 2
    a3 = 4 * min_overlap
    b3 = -2 * min_overlap * (height + width)
    c3 = (min_overlap - 1) * width * height
    sq3 = np.sqrt(b3 ** 2 - 4 * a3 * c3)
    r3 = (b3 + sq3) / 2
    return min(r1, r2, r3)


def gaussian2D(shape, sigma=1):
    m, n = [(ss - 1.0) / 2.0 for ss in shape]
    y, x = np.ogrid[-m:m + 1, -n:n + 1]
    h = np.exp(-(x * x + y * y) / (2 * sigma * sigma))
    h[h < np.finfo(h.dtype).eps * h.max()] = 0
    return h


def draw_umich_gaussian(heatmap, center, radius, k=1):
    diameter = 2 * radius + 1
    gaussian = gaussian2D((diameter, diameter), sigma=diameter / 6)
    x, y = int(center[0]), int(center[1])
    height, width = heatmap.shape[0:2]
    left, right = min(x, radius), min(width - x, radius + 1)
    top, bottom = min(y, radius), min(height - y, radius + 1)
    masked_heatmap = heatmap[y - top:y + bottom, x - left:x + right]
    masked_gaussian = gaussian[radius - top:radius + bottom,
                               radius - left:radius + right]
    if min(masked_gaussian.shape) > 0 and min(masked_heatmap.shape) > 0:
        np.maximum(masked_heatmap, masked_gaussian * k, out=masked_heatmap)
    return heatmap


def build_targets(ann1, ann2, out_h, out_w, max_objs, num_classes):
    num_objs = ann1.shape[0]
    hm = np.zeros((num_classes, out_h, out_w), dtype=np.float16)
    wh = np.zeros((max_objs, 8), dtype=np.float16)
    v = np.zeros((max_objs,), dtype=np.float16)
    ind = np.zeros((max_objs,), dtype=np.int64)
    reg_mask = np.zeros((max_objs,), dtype=np.uint8)
    ids = np.zeros((max_objs,), dtype=np.int64)
    for k in range(num_objs):
        label = np.array(ann1[k], dtype=np.float32)
        bbox = label[0:4].copy()
        cls_id = int(label[-4])
        bbox[[0, 2]] = bbox[[0, 2]] * out_w
        bbox[[1, 3]] = bbox[[1, 3]] * out_h
        bbox_amodal = copy.deepcopy(bbox)
        bbox_amodal[0] = bbox_amodal[0] - bbox_amodal[2] / 2.0
        bbox_amodal[1] = bbox_amodal[1] - bbox_amodal[3] / 2.0
        bbox_amodal[2] = bbox_amodal[0] + bbox_amodal[2]
        bbox_amodal[3] = bbox_amodal[1] + bbox_amodal[3]
        bbox[0] = np.clip(bbox[0], 0, out_w - 1)
        bbox[1] = np.clip(bbox[1], 0, out_h - 1)
        h = bbox[3]
        w = bbox[2]
        p_id = label[-3]
        radiu0 = gaussian_radius((math.ceil(h), math.ceil(w)))
        radius = max(0, int(radiu0))
        ct = np.array([bbox[0], bbox[1]], dtype=np.float16)
        ct_int = ct.astype(np.int32)
        draw_umich_gaussian(hm[cls_id], ct_int, radius)
        for t1 in ann2:
            if p_id == t1[-3]:
                bbox_t1 = np.array(t1[0:4], dtype=np.float32)
                bbox_t1[[0, 2]] = bbox_t1[[0, 2]] * out_w
                bbox_t1[[1, 3]] = bbox_t1[[1, 3]] * out_h
                bbox_amodal_t1 = copy.deepcopy(bbox_t1)
                bbox_amodal_t1[0] = bbox_amodal_t1[0] - bbox_amodal_t1[2] / 2.0
                bbox_amodal_t1[1] = bbox_amodal_t1[1] - bbox_amodal_t1[3] / 2.0
                bbox_amodal_t1[2] = bbox_amodal_t1[0] + bbox_amodal_t1[2]
                bbox_amodal_t1[3] = bbox_amodal_t1[1] + bbox_amodal_t1[3]
                bbox_t1[0] = np.clip(bbox_t1[0], 0, out_w - 1)
                bbox_t1[1] = np.clip(bbox_t1[1], 0, out_h - 1)
                h_t1 = bbox_t1[3]
                w_t1 = bbox_t1[2]
                if (h > 0 and w > 0) and (h_t1 > 0 and w_t1 > 0):
                    ind[k] = ct_int[1] * out_w + ct_int[0]
                    wh[k] = (ct_int[0] - bbox_amodal[0], bbox_amodal[2] - ct_int[0],
                             ct_int[1] - bbox_amodal[1], bbox_amodal[3] - ct_int[1],
                             ct_int[0] - bbox_amodal_t1[0], bbox_amodal_t1[2] - ct_int[0],
                             ct_int[1] - bbox_amodal_t1[1], bbox_amodal_t1[3] - ct_int[1])
                    reg_mask[k] = 1
                    ids[k] = int(p_id)
                    v[k] = label[-2]
                    break
    return hm, wh, v, ind, reg_mask, ids


def build_batch_targets(ann1_np, ann2_np):
    """All host-side targets for the whole batch, before any device work."""
    B = ann1_np.shape[0]
    hm_b = np.zeros((B, HW), np.float32)
    wh_b = np.zeros((B, MAX_OBJS, 8), np.float32)
    v_b = np.zeros((B, MAX_OBJS, 1), np.float32)
    ind_b = np.zeros((B, MAX_OBJS), np.int32)
    mask_b = np.zeros((B, MAX_OBJS, 1), np.float32)
    ids_b = np.zeros((B, MAX_OBJS, 1), np.int32)
    valid = np.zeros((B,), np.float32)
    for j in range(B):
        a1 = ann1_np[j]
        a1 = a1[a1[:, 4] != -1]
        a2 = ann2_np[j]
        a2 = a2[a2[:, 4] != -1]
        if a1.shape[0] == 0:
            continue
        valid[j] = 1.0
        hm, wh, v, ind, reg_mask, ids = build_targets(
            a1, a2, OUT_H, OUT_W, MAX_OBJS, NUM_CLASSES)
        hm_b[j] = hm[0].astype(np.float32).reshape(HW)
        wh_b[j] = wh.astype(np.float32)
        v_b[j, :, 0] = v.astype(np.float32)
        ind_b[j] = ind.astype(np.int32)
        mask_b[j, :, 0] = reg_mask.astype(np.float32)
        ids_b[j, :, 0] = ids.astype(np.int32)
    return hm_b, wh_b, v_b, ind_b, mask_b, ids_b, valid


# =====================================================================
# Pallas kernel A: CenterNet focal loss, batched over B (one grid step per
# batch element, whole lane-dense heatmap in VMEM).
# =====================================================================
def _focal_kernel(logit_ref, hm_ref, out_ref):
    x = logit_ref[0]                                    # (H8, 128) f32 logits
    gt = hm_ref[0]                                      # (H8, 128) f32 in [0, 1]

    # log-sigmoid reformulation, exactly equal (up to fp) to
    # log(clip(sigmoid(x), 1e-4, 1-1e-4)) thanks to the monotone clip.
    xc = jnp.clip(x, -30.0, 30.0)                       # avoid exp overflow; clamp-safe
    e = jnp.exp(-xc)                                    # EUP
    sp = jnp.log(1.0 + e)                               # softplus(-x); EUP
    log_p = jnp.clip(-sp, _LOG_LO, _LOG_HI)             # log(pred) after clamp
    log_1mp = jnp.clip(-xc - sp, _LOG_LO, _LOG_HI)      # log(1-pred) after clamp
    pred = jnp.clip(pl.reciprocal(1.0 + e, approx=True), 1e-4, 1.0 - 1e-4)

    pos = (gt == 1.0).astype(jnp.float32)
    neg = 1.0 - pos                                     # gt <= 1 always
    omgt = 1.0 - gt
    neg_w = omgt * omgt
    neg_w = neg_w * neg_w                               # (1 - gt)^4
    omp = 1.0 - pred

    pos_loss = log_p * (omp * omp) * pos
    neg_loss = log_1mp * (pred * pred) * neg_w * neg

    npos = jnp.sum(pos, keepdims=True)                  # (1, 1)
    psum = jnp.sum(pos_loss, keepdims=True)
    nsum = jnp.sum(neg_loss, keepdims=True)
    loss = jnp.where(npos > 0.0, -(psum + nsum) / jnp.maximum(npos, 1.0), -nsum)
    out_ref[...] = jnp.reshape(loss, (1, 1, 1))


def focal_loss_batched(cls_maps, hm_maps):
    B, H8, L = cls_maps.shape
    out = pl.pallas_call(
        _focal_kernel,
        out_shape=jax.ShapeDtypeStruct((B, 1, 1), jnp.float32),
        grid=(B,),
        in_specs=[pl.BlockSpec((1, H8, L), lambda b: (b, 0, 0)),
                  pl.BlockSpec((1, H8, L), lambda b: (b, 0, 0))],
        out_specs=pl.BlockSpec((1, 1, 1), lambda b: (b, 0, 0)),
        compiler_params=pltpu.CompilerParams(dimension_semantics=("parallel",)),
    )(cls_maps, hm_maps)
    return out[:, 0, 0]


# =====================================================================
# Pallas kernel B (fused, batched over B): masked smooth-L1 for regression and
# visibility + the four ID-head losses.  Classifier weights (bf16, padded to
# 640 classes) use batch-independent index_maps so they stay VMEM-resident.
# =====================================================================
def _fused_kernel(reg_pred_ref, wh_ref, vis_pred_ref, v_ref, mask_ref, ids_ref,
                  e64_ref, e128_ref, e256_ref, eend_ref,
                  w64_ref, b64_ref, w128_ref, b128_ref,
                  w256_ref, b256_ref, wend_ref, bend_ref,
                  reg_out_ref, vis_out_ref, id_out_ref):
    m = mask_ref[0]                                     # (M, 1) reg_mask as f32

    # ---- regression masked smooth-L1 sum (RegLoss body) ----
    d = (reg_pred_ref[0] - wh_ref[0]) * m               # (M, 8)
    ad = jnp.abs(d)
    reg_sum = jnp.sum(jnp.where(ad < 1.0, 0.5 * d * d, ad - 0.5), keepdims=True)
    reg_out_ref[...] = jnp.reshape(reg_sum, (1, 1, 1))

    # ---- visibility loss (sigmoid+clamp commutes with the gather) ----
    # TODO(synk): RegLoss_weighted definition not provided; implemented as the
    # standard CenterNet masked smooth-L1 (same as RegLoss).
    vx = vis_pred_ref[0]                                # (M, 1) raw logits
    vp = jnp.clip(1.0 / (1.0 + jnp.exp(-vx)), 1e-4, 1.0 - 1e-4)
    dv = (vp - v_ref[0]) * m
    adv = jnp.abs(dv)
    vis_sum = jnp.sum(jnp.where(adv < 1.0, 0.5 * dv * dv, adv - 0.5), keepdims=True)
    vis_out_ref[...] = jnp.reshape(vis_sum, (1, 1, 1))

    # ---- ID loss: 4 heads share the in-kernel one-hot and per-row weights ----
    ids_col = ids_ref[0]                                # (M, 1) int32
    lane = jax.lax.broadcasted_iota(jnp.int32, (MAX_OBJS, NID_PAD), 1)
    sel = (lane == ids_col).astype(jnp.float32)         # one-hot built in-kernel
    w_row = m * v_ref[0]                                # reg_mask * v  (M, 1)

    def head(emb_ref, w_ref, b_ref):
        x = emb_ref[0]                                  # (M, C) f32
        inv = jax.lax.rsqrt(jnp.maximum(jnp.sum(x * x, axis=1, keepdims=True),
                                        1e-24))         # == 1 / max(||x||, 1e-12)
        xn = (EMB_SCALE * inv) * x                      # emb_scale * F.normalize(x)
        logits = jnp.dot(xn.astype(jnp.bfloat16), w_ref[...],
                         preferred_element_type=jnp.float32) + b_ref[...]
        mx = jnp.max(logits, axis=1, keepdims=True)     # max-subtracted log-softmax
        lse = jnp.log(jnp.sum(jnp.exp(logits - mx), axis=1, keepdims=True)) + mx
        picked = jnp.sum(sel * logits, axis=1, keepdims=True)   # logits[i, ids[i]]
        return jnp.sum(w_row * (picked - lse), keepdims=True)   # (1, 1)

    id_sum = (head(e64_ref, w64_ref, b64_ref)
              + head(e128_ref, w128_ref, b128_ref)
              + head(e256_ref, w256_ref, b256_ref)
              + head(eend_ref, wend_ref, bend_ref))
    id_out_ref[...] = jnp.reshape(id_sum, (1, 1, 1))


def fused_losses(reg_pred, wh, vis_pred, v, mask, ids,
                 e64, e128, e256, eend,
                 w64, b64, w128, b128, w256, b256, wend, bend):
    B, M, _ = reg_pred.shape

    def bspec(c):
        return pl.BlockSpec((1, M, c), lambda b: (b, 0, 0))

    def wspec(cin):
        return pl.BlockSpec((cin, NID_PAD), lambda b: (0, 0))   # batch-independent

    bias_spec = pl.BlockSpec((1, NID_PAD), lambda b: (0, 0))
    out_spec = pl.BlockSpec((1, 1, 1), lambda b: (b, 0, 0))

    outs = pl.pallas_call(
        _fused_kernel,
        out_shape=(jax.ShapeDtypeStruct((B, 1, 1), jnp.float32),) * 3,
        grid=(B,),
        in_specs=[bspec(8), bspec(8), bspec(1), bspec(1), bspec(1), bspec(1),
                  bspec(64), bspec(128), bspec(256), bspec(128),
                  wspec(64), bias_spec, wspec(128), bias_spec,
                  wspec(256), bias_spec, wspec(128), bias_spec],
        out_specs=(out_spec,) * 3,
        compiler_params=pltpu.CompilerParams(dimension_semantics=("parallel",)),
    )(reg_pred, wh, vis_pred, v, mask, ids, e64, e128, e256, eend,
      w64, b64, w128, b128, w256, b256, wend, bend)
    return tuple(o[:, 0, 0] for o in outs)


# =====================================================================
# Params (classifiers, padded to 640 classes; weights kept in bf16 for MXU)
# =====================================================================
def init_linear(key, in_dim, n_out=NID):
    kw, kb = jax.random.split(key)
    bound = 1.0 / math.sqrt(in_dim)
    W = jax.random.uniform(kw, (in_dim, n_out), jnp.float32, -bound, bound)
    b = jax.random.uniform(kb, (n_out,), jnp.float32, -bound, bound)
    Wp = jnp.zeros((in_dim, NID_PAD), jnp.float32).at[:, :n_out].set(W)
    Wp = Wp.astype(jnp.bfloat16)
    bp = jnp.full((1, NID_PAD), -1e9, jnp.float32).at[0, :n_out].set(b)
    return Wp, bp


# =====================================================================
# Full forward
# =====================================================================
def total_loss_forward(classifications, regressions, viss,
                       identis_64, identis_128, identis_256, identis_end,
                       annotations1, annotations2, s_det, s_id, params):
    B = classifications.shape[0]
    ann1_np = np.asarray(annotations1)
    ann2_np = np.asarray(annotations2)

    # ---- all host-side target building up front ----
    hm_b, wh_b, v_b, ind_b, mask_b, ids_b, valid = build_batch_targets(ann1_np, ann2_np)
    num = mask_b.sum(axis=(1, 2)).astype(np.float32)     # valid-object count per element

    # single H2D copy per batched array
    hm_d = jnp.asarray(hm_b).reshape(B, HW // 128, 128)
    wh_d = jnp.asarray(wh_b)
    v_d = jnp.asarray(v_b)
    ind_d = jnp.asarray(ind_b)
    mask_d = jnp.asarray(mask_b)
    ids_d = jnp.asarray(ids_b)
    valid_d = jnp.asarray(valid)
    num_d = jnp.asarray(num)

    # ---- (A) focal loss over full heatmaps, batched ----
    cls_maps = classifications[:, :, 0].reshape(B, HW // 128, 128)
    cls_losses = focal_loss_batched(cls_maps, hm_d)                  # (B,)

    # ---- batched row gathers at ind (XLA glue; 128 rows per head) ----
    gather_rows = jax.vmap(lambda f, i: jnp.take(f, i, axis=0))
    reg_pred = gather_rows(regressions, ind_d)                       # (B, M, 8)
    vis_pred = gather_rows(viss, ind_d)                              # (B, M, 1)
    e64 = gather_rows(identis_64, ind_d)
    e128 = gather_rows(identis_128, ind_d)
    e256 = gather_rows(identis_256, ind_d)
    eend = gather_rows(identis_end, ind_d)

    # ---- (B) fused reg + vis + 4-head ID losses, batched ----
    (w64, b64) = params['c64']
    (w128, b128) = params['c128']
    (w256, b256) = params['c256']
    (wend, bend) = params['cend']
    reg_sums, vis_sums, id_sums = fused_losses(
        reg_pred, wh_d, vis_pred, v_d, mask_d, ids_d,
        e64, e128, e256, eend,
        w64, b64, w128, b128, w256, b256, wend, bend)

    cls_l = jnp.where(valid_d > 0, cls_losses, 0.0)
    reg_l = jnp.where(valid_d > 0, reg_sums / (num_d + 1e-4), 0.0)
    vis_l = jnp.where(valid_d > 0, vis_sums / (num_d + 1e-4), 0.0)
    # TODO(synk): the original divides the ID loss by id_target.shape[0] with no
    # epsilon (NaN when there are annotations but zero frame-2 matches); we
    # return 0 for that degenerate case instead.
    id_l = jnp.where(num_d > 0, -id_sums / jnp.maximum(num_d, 1.0), 0.0)

    cls_out = jnp.mean(cls_l.astype(jnp.float16), keepdims=True)
    reg_out = jnp.mean(reg_l.astype(jnp.float16), keepdims=True)
    vis_out = jnp.mean(vis_l.astype(jnp.float16), keepdims=True)
    id_out = jnp.mean(id_l, keepdims=True)
    return cls_out, reg_out, vis_out, id_out, s_det, s_id


# =====================================================================
# Demo
# =====================================================================
if __name__ == "__main__":
    B = 2

    key = jax.random.PRNGKey(0)
    ks = jax.random.split(key, 11)
    classifications = jax.random.normal(ks[0], (B, HW, 1), jnp.float32)
    regressions = 2.0 * jax.random.normal(ks[1], (B, HW, 8), jnp.float32)
    viss = jax.random.normal(ks[2], (B, HW, 1), jnp.float32)
    identis_64 = jax.random.normal(ks[3], (B, HW, 64), jnp.float32)
    identis_128 = jax.random.normal(ks[4], (B, HW, 128), jnp.float32)
    identis_256 = jax.random.normal(ks[5], (B, HW, 256), jnp.float32)
    identis_end = jax.random.normal(ks[6], (B, HW, 128), jnp.float32)

    params = {
        'c64': init_linear(ks[7], 64),
        'c128': init_linear(ks[8], 128),
        'c256': init_linear(ks[9], 256),
        'cend': init_linear(ks[10], 128),
    }

    # annotations: [cx, cy, w, h, cls, pid, vis, occ] (normalized coords);
    # padding rows have column 4 == -1.
    annotations1 = np.full((B, 6, 8), -1.0, dtype=np.float32)
    annotations2 = np.full((B, 6, 8), -1.0, dtype=np.float32)
    annotations1[0, 0] = [0.30, 0.40, 0.10, 0.20, 0, 12, 0.9, 0.8]
    annotations1[0, 1] = [0.60, 0.55, 0.15, 0.25, 0, 45, 0.7, 0.6]
    annotations1[0, 2] = [0.75, 0.30, 0.08, 0.12, 0, 99, 0.5, 0.9]   # no match in next frame
    annotations2[0, 0] = [0.32, 0.42, 0.11, 0.21, 0, 12, 0.9, 0.8]
    annotations2[0, 1] = [0.62, 0.57, 0.14, 0.24, 0, 45, 0.7, 0.6]
    annotations1[1, 0] = [0.45, 0.50, 0.20, 0.30, 0, 7, 0.8, 0.7]
    annotations1[1, 1] = [0.20, 0.70, 0.12, 0.18, 0, 300, 0.6, 0.5]
    annotations2[1, 0] = [0.47, 0.52, 0.19, 0.29, 0, 7, 0.8, 0.7]
    annotations2[1, 1] = [0.22, 0.72, 0.12, 0.18, 0, 300, 0.6, 0.5]

    s_det = jnp.asarray(-1.85, jnp.float32)
    s_id = jnp.asarray(-1.05, jnp.float32)

    outs = total_loss_forward(classifications, regressions, viss,
                              identis_64, identis_128, identis_256, identis_end,
                              annotations1, annotations2, s_det, s_id, params)
    jax.block_until_ready(outs)
    print("KERNEL_OK")
</pallas_src>

<mosaic_0001>
module attributes {stable_mosaic.version = 11 : i64} {
  func.func @_focal_kernel(%arg0: i32, %arg1: memref<1x32x128xf32, #tpu.memory_space<vmem>>, %arg2: memref<1x32x128xf32, #tpu.memory_space<vmem>>, %arg3: memref<1x1x1xf32, #tpu.memory_space<vmem>>) attributes {dimension_semantics = [#tpu.dimension_semantics<parallel>], iteration_bounds = array<i64: 2>, scalar_prefetch = 0 : i64, scratch_operands = 0 : i64, tpu.core_type = #tpu.core_type<tc>, window_params = [{transform_indices = @transform_0, window_bounds = array<i64: 1, 32, 128>}, {transform_indices = @transform_1, window_bounds = array<i64: 1, 32, 128>}, {transform_indices = @transform_2, window_bounds = array<i64: 1, 1, 1>}]} {
    %c0 = arith.constant 0 : index
    %c0_0 = arith.constant 0 : index
    %c0_1 = arith.constant 0 : index
    %0 = vector.load %arg1[%c0, %c0_0, %c0_1] : memref<1x32x128xf32, #tpu.memory_space<vmem>>, vector<1x32x128xf32>
    %1 = vector.shape_cast %0 : vector<1x32x128xf32> to vector<32x128xf32>
    %c0_2 = arith.constant 0 : index
    %c0_3 = arith.constant 0 : index
    %c0_4 = arith.constant 0 : index
    %2 = vector.load %arg2[%c0_2, %c0_3, %c0_4] : memref<1x32x128xf32, #tpu.memory_space<vmem>>, vector<1x32x128xf32>
    %3 = vector.shape_cast %2 : vector<1x32x128xf32> to vector<32x128xf32>
    %cst = arith.constant -3.000000e+01 : f32
    %cst_5 = arith.constant 3.000000e+01 : f32
    %4 = vector.broadcast %cst : f32 to vector<32x128xf32>
    %5 = arith.maximumf %4, %1 : vector<32x128xf32>
    %6 = vector.broadcast %cst_5 : f32 to vector<32x128xf32>
    %7 = arith.minimumf %6, %5 : vector<32x128xf32>
    %cst_6 = arith.constant 0.000000e+00 : f32
    %8 = vector.broadcast %cst_6 : f32 to vector<32x128xf32>
    %9 = arith.subf %8, %7 : vector<32x128xf32>
    %10 = math.exp %9 : vector<32x128xf32>
    %cst_7 = arith.constant 1.000000e+00 : f32
    %11 = vector.broadcast %cst_7 : f32 to vector<32x128xf32>
    %12 = arith.addf %11, %10 : vector<32x128xf32>
    %13 = math.log %12 : vector<32x128xf32>
    %cst_8 = arith.constant 0.000000e+00 : f32
    %14 = vector.broadcast %cst_8 : f32 to vector<32x128xf32>
    %15 = arith.subf %14, %13 : vector<32x128xf32>
    %cst_9 = arith.constant -9.21034049 : f32
    %cst_10 = arith.constant -1.000050e-04 : f32
    %16 = vector.broadcast %cst_9 : f32 to vector<32x128xf32>
    %17 = arith.maximumf %16, %15 : vector<32x128xf32>
    %18 = vector.broadcast %cst_10 : f32 to vector<32x128xf32>
    %19 = arith.minimumf %18, %17 : vector<32x128xf32>
    %cst_11 = arith.constant 0.000000e+00 : f32
    %20 = vector.broadcast %cst_11 : f32 to vector<32x128xf32>
    %21 = arith.subf %20, %7 : vector<32x128xf32>
    %22 = arith.subf %21, %13 : vector<32x128xf32>
    %cst_12 = arith.constant -9.21034049 : f32
    %cst_13 = arith.constant -1.000050e-04 : f32
    %23 = vector.broadcast %cst_12 : f32 to vector<32x128xf32>
    %24 = arith.maximumf %23, %22 : vector<32x128xf32>
    %25 = vector.broadcast %cst_13 : f32 to vector<32x128xf32>
    %26 = arith.minimumf %25, %24 : vector<32x128xf32>
    %cst_14 = arith.constant 1.000000e+00 : f32
    %27 = vector.broadcast %cst_14 : f32 to vector<32x128xf32>
    %28 = arith.addf %27, %10 : vector<32x128xf32>
    %29 = tpu.reciprocal %28 {approx = true} : vector<32x128xf32> -> vector<32x128xf32>
    %cst_15 = arith.constant 9.99999974E-5 : f32
    %cst_16 = arith.constant 0.999899983 : f32
    %30 = vector.broadcast %cst_15 : f32 to vector<32x128xf32>
    %31 = arith.maximumf %30, %29 : vector<32x128xf32>
    %32 = vector.broadcast %cst_16 : f32 to vector<32x128xf32>
    %33 = arith.minimumf %32, %31 : vector<32x128xf32>
    %cst_17 = arith.constant 1.000000e+00 : f32
    %34 = vector.broadcast %cst_17 : f32 to vector<32x128xf32>
    %35 = arith.cmpf oeq, %3, %34 : vector<32x128xf32>
    %36 = arith.extui %35 : vector<32x128xi1> to vector<32x128xi32>
    %37 = arith.sitofp %36 : vector<32x128xi32> to vector<32x128xf32>
    %cst_18 = arith.constant 1.000000e+00 : f32
    %38 = vector.broadcast %cst_18 : f32 to vector<32x128xf32>
    %39 = arith.subf %38, %37 : vector<32x128xf32>
    %cst_19 = arith.constant 1.000000e+00 : f32
    %40 = vector.broadcast %cst_19 : f32 to vector<32x128xf32>
    %41 = arith.subf %40, %3 : vector<32x128xf32>
    %42 = arith.mulf %41, %41 : vector<32x128xf32>
    %43 = arith.mulf %42, %42 : vector<32x128xf32>
    %cst_20 = arith.constant 1.000000e+00 : f32
    %44 = vector.broadcast %cst_20 : f32 to vector<32x128xf32>
    %45 = arith.subf %44, %33 : vector<32x128xf32>
    %46 = arith.mulf %45, %45 : vector<32x128xf32>
    %47 = arith.mulf %19, %46 : vector<32x128xf32>
    %48 = arith.mulf %47, %37 : vector<32x128xf32>
    %49 = arith.mulf %33, %33 : vector<32x128xf32>
    %50 = arith.mulf %26, %49 : vector<32x128xf32>
    %51 = arith.mulf %50, %43 : vector<32x128xf32>
    %52 = arith.mulf %51, %39 : vector<32x128xf32>
    %53 = vector.shape_cast %37 : vector<32x128xf32> to vector<1x32x128xf32>
    %cst_21 = arith.constant dense<0.000000e+00> : vector<1xf32>
    %54 = vector.multi_reduction <add>, %53, %cst_21 [1, 2] : vector<1x32x128xf32> to vector<1xf32>
    %55 = vector.shape_cast %54 : vector<1xf32> to vector<1x1x1xf32>
    %56 = vector.extract %55[0, 0, 0] : f32 from vector<1x1x1xf32>
    %57 = vector.broadcast %56 : f32 to vector<1x1xf32>
    %58 = vector.shape_cast %48 : vector<32x128xf32> to vector<1x32x128xf32>
    %cst_22 = arith.constant dense<0.000000e+00> : vector<1xf32>
    %59 = vector.multi_reduction <add>, %58, %cst_22 [1, 2] : vector<1x32x128xf32> to vector<1xf32>
    %60 = vector.shape_cast %59 : vector<1xf32> to vector<1x1x1xf32>
    %61 = vector.extract %60[0, 0, 0] : f32 from vector<1x1x1xf32>
    %62 = vector.broadcast %61 : f32 to vector<1x1xf32>
    %63 = vector.shape_cast %52 : vector<32x128xf32> to vector<1x32x128xf32>
    %cst_23 = arith.constant dense<0.000000e+00> : vector<1xf32>
    %64 = vector.multi_reduction <add>, %63, %cst_23 [1, 2] : vector<1x32x128xf32> to vector<1xf32>
    %65 = vector.shape_cast %64 : vector<1xf32> to vector<1x1x1xf32>
    %66 = vector.extract %65[0, 0, 0] : f32 from vector<1x1x1xf32>
    %67 = vector.broadcast %66 : f32 to vector<1x1xf32>
    %cst_24 = arith.constant 0.000000e+00 : f32
    %68 = vector.broadcast %cst_24 : f32 to vector<1x1xf32>
    %69 = arith.cmpf ogt, %57, %68 : vector<1x1xf32>
    %70 = arith.addf %62, %67 : vector<1x1xf32>
    %cst_25 = arith.constant 0.000000e+00 : f32
    %71 = vector.broadcast %cst_25 : f32 to vector<1x1xf32>
    %72 = arith.subf %71, %70 : vector<1x1xf32>
    %cst_26 = arith.constant 1.000000e+00 : f32
    %73 = vector.broadcast %cst_26 : f32 to vector<1x1xf32>
    %74 = arith.maximumf %57, %73 : vector<1x1xf32>
    %75 = arith.divf %72, %74 : vector<1x1xf32>
    %cst_27 = arith.constant 0.000000e+00 : f32
    %76 = vector.broadcast %cst_27 : f32 to vector<1x1xf32>
    %77 = arith.subf %76, %67 : vector<1x1xf32>
    %78 = arith.select %69, %75, %77 : vector<1x1xi1>, vector<1x1xf32>
    %79 = vector.shape_cast %78 : vector<1x1xf32> to vector<1x1x1xf32>
    %c0_28 = arith.constant 0 : index
    %c0_29 = arith.constant 0 : index
    %c0_30 = arith.constant 0 : index
    %80 = vector.load %arg3[%c0_28, %c0_29, %c0_30] : memref<1x1x1xf32, #tpu.memory_space<vmem>>, vector<1x1x1xf32>
    tpu.vector_store %arg3[%c0_28, %c0_29, %c0_30], %79 {strides = array<i32>} : memref<1x1x1xf32, #tpu.memory_space<vmem>>, vector<1x1x1xf32>,
    return
  }
  func.func @transform_0(%arg0: i32) -> (i32, i32, i32) {
    %c0_i32 = arith.constant 0 : i32
    %c0_i32_0 = arith.constant 0 : i32
    %c0_i32_1 = arith.constant 0 : i32
    return %arg0, %c0_i32, %c0_i32_0 : i32, i32, i32
  }
  func.func @transform_1(%arg0: i32) -> (i32, i32, i32) {
    %c0_i32 = arith.constant 0 : i32
    %c0_i32_0 = arith.constant 0 : i32
    %c0_i32_1 = arith.constant 0 : i32
    return %arg0, %c0_i32, %c0_i32_0 : i32, i32, i32
  }
  func.func @transform_2(%arg0: i32) -> (i32, i32, i32) {
    %c0_i32 = arith.constant 0 : i32
    %c0_i32_0 = arith.constant 0 : i32
    %c0_i32_1 = arith.constant 0 : i32
    return %arg0, %c0_i32, %c0_i32_0 : i32, i32, i32
  }
}

</mosaic_0001>

<llo_original>
// kernel: tpu_custom_call.1
$region0: #{tpu_custom_call.1}
  #allocation0 [shape = 'u32[]', space=smem, size = 0x4, offset = 0x4, fixed_abs, tag = 'smem constant byte address 0x4 - core index']
  #allocation1 [shape = 'u32[144,128]{1,0:T(1,128)}', space=vmem, size = 0x12000, scoped, tag = 'internal scratch']
  %s0 = inlined_call_operand.hbm [shape: f32[2,32,128], index: 0, kind: input, shape index: {}]
  %s1 = inlined_call_operand.hbm [shape: f32[2,32,128], index: 1, kind: input, shape index: {}]
  %s2 = inlined_call_operand.vmem [shape: f32[2,1,1], index: 2, kind: output, shape index: {}]
  %s3 = sld [smem:[#allocation0]]
  $region49: #{tpu_custom_call.1} parent=0
    _
  %s5 = ssub.s32 1, %s3
  %s6 = scalar_select 0, %s5, %s3
  $region1: #{tpu_custom_call.1} parent=0
    #allocation2 [shape = 'u8[32768]{0}', space=vmem, size = 0x8000, scoped, tag = 'input window, operand 0']
    #allocation3 [shape = 's32[2]{0}', space=sflag, size = 0x8, scoped, tag = 'scoped memory for tpu_custom_call.1']
    #allocation4 [shape = 'u8[32768]{0}', space=vmem, size = 0x8000, scoped, tag = 'input window, operand 1']
    #allocation5 [shape = 's32[2]{0}', space=sflag, size = 0x8, scoped, tag = 'scoped memory for tpu_custom_call.1']
    %7 = vsyncpa [#allocation3], 0
    %s8 = scalar_lea.sflag [#allocation3], 1
    %9 = vsyncpa %s8, 0
    %10 = vsyncpa [#allocation5], 0
    %s11 = scalar_lea.sflag [#allocation5], 1
    %12 = vsyncpa %s11, 0
    loop: start=0, step=1, limit=4
    $region2: #{tpu_custom_call.1} parent=1 // loop_pre_header
      _
    $region3: #{tpu_custom_call.1} parent=1 // loop_header
      %s14 = sphi 0, %s18
      %p15 = scmp.ge.s32.totalorder %s14, 4
      %s24 = sphi 0, %s26
      %s27 = sphi 0, %s24
      %s28 = sphi 0, %s27
      %s44 = sphi 0, %s28
      %s50 = sphi 0, %s52
      %s53 = sphi 0, %s50
      %s54 = sphi 0, %s53
      %s70 = sphi 0, %s54
      %s76 = sphi 0, %s78
      %s79 = sphi 0, %s76
      %s80 = sphi 0, %s79
      %s96 = sphi 0, %s80
    $region4: #{tpu_custom_call.1} parent=1 // loop_header_branch
      %17 = sbr.rel (%p15) target = $region8
    $region5: #{tpu_custom_call.1} parent=1 // loop_body
      %s19 = ssub.s32 %s14, 1
      %s20 = ssub.s32 %s14, 2
      %s21 = sadd.s32 %s14, 1
      %s22 = ssub.s32 %s14, %s21
      %p23 = scmp.eq.s32.totalorder %s22, 0
      %s25 = sadd.s32 %s24, 1
      %s26 = scalar_select %p23, %s24, %s25
      %p29 = pneg %p23
      %p30 = scmp.eq.s32.totalorder %s14, 1
      %p31 = por %p29, %p30
      %p32 = scmp.ne.s32.totalorder %s24, %s27
      %p33 = scmp.eq.s32.totalorder %s14, 0
      %p34 = por %p32, %p33
      %p35 = scmp.ne.s32.totalorder %s24, %s27
      %p36 = scmp.eq.s32.totalorder %s19, 1
      %p37 = por %p35, %p36
      %p38 = scmp.ne.s32.totalorder %s27, %s28
      %p39 = scmp.eq.s32.totalorder %s19, 0
      %p40 = por %p38, %p39
      %p41 = scmp.ne.s32.totalorder %s27, %s28
      %p42 = scmp.eq.s32.totalorder %s20, 1
      %p43 = por %p41, %p42
      %p45 = scmp.ne.s32.totalorder %s28, %s44
      %p46 = scmp.eq.s32.totalorder %s20, 0
      %p47 = por %p45, %p46
      %s48 = ssub.s32 %s14, %s21
      %p49 = scmp.eq.s32.totalorder %s48, 0
      %s51 = sadd.s32 %s50, 1
      %s52 = scalar_select %p49, %s50, %s51
      %p55 = pneg %p49
      %p56 = scmp.eq.s32.totalorder %s14, 1
      %p57 = por %p55, %p56
      %p58 = scmp.ne.s32.totalorder %s50, %s53
      %p59 = scmp.eq.s32.totalorder %s14, 0
      %p60 = por %p58, %p59
      %p61 = scmp.ne.s32.totalorder %s50, %s53
      %p62 = scmp.eq.s32.totalorder %s19, 1
      %p63 = por %p61, %p62
      %p64 = scmp.ne.s32.totalorder %s53, %s54
      %p65 = scmp.eq.s32.totalorder %s19, 0
      %p66 = por %p64, %p65
      %p67 = scmp.ne.s32.totalorder %s53, %s54
      %p68 = scmp.eq.s32.totalorder %s20, 1
      %p69 = por %p67, %p68
      %p71 = scmp.ne.s32.totalorder %s54, %s70
      %p72 = scmp.eq.s32.totalorder %s20, 0
      %p73 = por %p71, %p72
      %s74 = ssub.s32 %s14, %s21
      %p75 = scmp.eq.s32.totalorder %s74, 0
      %s77 = sadd.s32 %s76, 1
      %s78 = scalar_select %p75, %s76, %s77
      %p81 = pneg %p75
      %p82 = scmp.eq.s32.totalorder %s14, 1
      %p83 = por %p81, %p82
      %p84 = scmp.ne.s32.totalorder %s76, %s79
      %p85 = scmp.eq.s32.totalorder %s14, 0
      %p86 = por %p84, %p85
      %p87 = scmp.ne.s32.totalorder %s76, %s79
      %p88 = scmp.eq.s32.totalorder %s19, 1
      %p89 = por %p87, %p88
      %p90 = scmp.ne.s32.totalorder %s79, %s80
      %p91 = scmp.eq.s32.totalorder %s19, 0
      %p92 = por %p90, %p91
      %p93 = scmp.ne.s32.totalorder %s79, %s80
      %p94 = scmp.eq.s32.totalorder %s20, 1
      %p95 = por %p93, %p94
      %p97 = scmp.ne.s32.totalorder %s80, %s96
      %p98 = scmp.eq.s32.totalorder %s20, 0
      %p99 = por %p97, %p98
      %p100 = scmp.le.s32.totalorder 1, %s14
      %p101 = scmp.lt.s32.totalorder %s14, 3
      %p102 = pnand %p100, %p101
      %p103 = pneg %p102
      // Predicated region
      $region9: #{tpu_custom_call.1} parent=5 // pred_check
        _
      $region10: #{tpu_custom_call.1} parent=5 // pred_check_branch
        %105 = sbr.rel (%p102) target = $region12
      $region11: #{tpu_custom_call.1} parent=5 // pred_region
        %s106 = ssub.s32 %s14, 1
      $region12: #{tpu_custom_call.1} parent=5 // pred_fallthru
        _
      %p107 = scmp.lt.s32.totalorder %s14, 2
      // Predicated region
      $region13: #{tpu_custom_call.1} parent=5 // pred_check
        %p108 = pneg %p107
      $region14: #{tpu_custom_call.1} parent=5 // pred_check_branch
        %110 = sbr.rel (%p108) target = $region16
      $region15: #{tpu_custom_call.1} parent=5 // pred_region
        // Predicated region
        $region17: #{tpu_custom_call.1} parent=15 // pred_check
          %p111 = pneg %p34
        $region18: #{tpu_custom_call.1} parent=15 // pred_check_branch
          %113 = sbr.rel (%p111) target = $region20
        $region19: #{tpu_custom_call.1} parent=15 // pred_region
          %s114 = sand.u32 %s24, 1
          %s115 = scalar_lea.sflag [#allocation3], %s114
          %s116 = sand.u32 %s24, 1
          %s117 = smul.addr %s116, 32
          %s118 = scalar_lea.vmem [#allocation2], %s117
          %s120 = ssub.s32 512, 512
          %121 = vsyncadd %s115, %s120
          %s122 = smul.addr %s14, 4
          %s123 = smul.addr %s122, 128
          %s124 = scalar_lea.hbm %s0, %s123
          %s125 = sshll.u32 %s118, 4
          %s126 = int_to_ptr.vmem [resolvable:$true] %s125
          %131 = dma.hbm_to_vmem [thread:$0]  %s124, 512, %s126, %s115, 128, 128, 8
        $region20: #{tpu_custom_call.1} parent=15 // pred_fallthru
          _
        // Predicated region
        $region21: #{tpu_custom_call.1} parent=15 // pred_check
          %p132 = pneg %p60
        $region22: #{tpu_custom_call.1} parent=15 // pred_check_branch
          %134 = sbr.rel (%p132) target = $region24
        $region23: #{tpu_custom_call.1} parent=15 // pred_region
          %s135 = sand.u32 %s50, 1
          %s136 = scalar_lea.sflag [#allocation5], %s135
          %s137 = sand.u32 %s50, 1
          %s138 = smul.addr %s137, 32
          %s139 = scalar_lea.vmem [#allocation4], %s138
          %s141 = ssub.s32 512, 512
          %142 = vsyncadd %s136, %s141
          %s143 = smul.addr %s14, 4
          %s144 = smul.addr %s143, 128
          %s145 = scalar_lea.hbm %s1, %s144
          %s146 = sshll.u32 %s139, 4
          %s147 = int_to_ptr.vmem [resolvable:$true] %s146
          %152 = dma.hbm_to_vmem [thread:$0]  %s145, 512, %s147, %s136, 128, 128, 8
        $region24: #{tpu_custom_call.1} parent=15 // pred_fallthru
          _
      $region16: #{tpu_custom_call.1} parent=5 // pred_fallthru
        _
      %p153 = scmp.le.s32.totalorder 1, %s14
      %p154 = scmp.lt.s32.totalorder %s14, 3
      %p155 = pnand %p153, %p154
      %p156 = pneg %p155
      // Predicated region
      $region25: #{tpu_custom_call.1} parent=5 // pred_check
        _
      $region26: #{tpu_custom_call.1} parent=5 // pred_check_branch
        %158 = sbr.rel (%p155) target = $region28
      $region27: #{tpu_custom_call.1} parent=5 // pred_region
        %s159 = ssub.s32 %s14, 1
        %s160 = sand.u32 %s27, 1
        %s161 = scalar_lea.sflag [#allocation3], %s160
        %s162 = sand.u32 %s27, 1
        %s163 = smul.addr %s162, 32
        %s164 = scalar_lea.vmem [#allocation2], %s163
        // Predicated region
        $region29: #{tpu_custom_call.1} parent=27 // pred_check
          %p165 = pneg %p40
        $region30: #{tpu_custom_call.1} parent=27 // pred_check_branch
          %167 = sbr.rel (%p165) target = $region32
        $region31: #{tpu_custom_call.1} parent=27 // pred_region
          %168 = dma.done %s161, 512
        $region32: #{tpu_custom_call.1} parent=27 // pred_fallthru
          _
        %s169 = sand.u32 %s53, 1
        %s170 = scalar_lea.sflag [#allocation5], %s169
        %s171 = sand.u32 %s53, 1
        %s172 = smul.addr %s171, 32
        %s173 = scalar_lea.vmem [#allocation4], %s172
        // Predicated region
        $region33: #{tpu_custom_call.1} parent=27 // pred_check
          %p174 = pneg %p66
        $region34: #{tpu_custom_call.1} parent=27 // pred_check_branch
          %176 = sbr.rel (%p174) target = $region36
        $region35: #{tpu_custom_call.1} parent=27 // pred_region
          %177 = dma.done %s170, 512
        $region36: #{tpu_custom_call.1} parent=27 // pred_fallthru
          _
        %s178 = sand.u32 %s27, 1
        %s179 = scalar_lea.sflag [#allocation3], %s178
        %s180 = sand.u32 %s27, 1
        %s181 = smul.addr %s180, 32
        %s182 = scalar_lea.vmem [#allocation2], %s181
        %p183 = pneg %p40
        %p184 = pneg %p37
        %s185 = sand.u32 %s53, 1
        %s186 = scalar_lea.sflag [#allocation5], %s185
        %s187 = sand.u32 %s53, 1
        %s188 = smul.addr %s187, 32
        %s189 = scalar_lea.vmem [#allocation4], %s188
        %p190 = pneg %p66
        %p191 = pneg %p63
        %p192 = pneg %p92
        %p193 = pneg %p89
        %p194 = scmp.lt.s32.totalorder %s19, 1
        %s195 = scalar_select %p194, %s19, 1
        %s196 = scalar_lea.vmem %s2, %s195
        %p197 = scmp.lt.s32.totalorder %s19, 1
        %s198 = scalar_select %p197, %s19, 1
        %s199 = scalar_lea.vmem %s2, %s198
        %v200 = vld [vmem:[%s164] sm:$0xff]
        %v201 = vld [vmem:[%s164 + $0x8] sm:$0xff]
        %v202 = vld [vmem:[%s164 + $0x10] sm:$0xff]
        %v203 = vld [vmem:[%s164 + $0x18] sm:$0xff]
        %v204 = vld [vmem:[%s173] sm:$0xff]
        %v205 = vld [vmem:[%s173 + $0x8] sm:$0xff]
        %v206 = vld [vmem:[%s173 + $0x10] sm:$0xff]
        %v207 = vld [vmem:[%s173 + $0x18] sm:$0xff]
        %v208 = vmax.f32 %v200, -30.0
        %v209 = vmax.f32 %v201, -30.0
        %v210 = vmax.f32 %v202, -30.0
        %v211 = vmax.f32 %v203, -30.0
        %v212 = vmin.f32 %v208, 30.0
        %v213 = vmin.f32 %v209, 30.0
        %v214 = vmin.f32 %v210, 30.0
        %v215 = vmin.f32 %v211, 30.0
        %v216 = vsub.f32 0.0, %v212
        %v217 = vsub.f32 0.0, %v213
        %v218 = vsub.f32 0.0, %v214
        %v219 = vsub.f32 0.0, %v215
        %v220 = vmul.f32 %v216, 1.442695
        %v221 = vpow.pop %v220
        %v222 = vmul.f32 %v217, 1.442695
        %v223 = vpow.pop %v222
        %v224 = vmul.f32 %v218, 1.442695
        %v225 = vpow.pop %v224
        %v226 = vmul.f32 %v219, 1.442695
        %v227 = vpow.pop %v226
        %v228 = vadd.f32 %v221, 1.0
        %v229 = vadd.f32 %v223, 1.0
        %v230 = vadd.f32 %v225, 1.0
        %v231 = vadd.f32 %v227, 1.0
        %v232 = vlog2.pop %v228
        %v233 = vmul.f32 %v232, 0.6931472
        %v234 = vlog2.pop %v229
        %v235 = vmul.f32 %v234, 0.6931472
        %v236 = vlog2.pop %v230
        %v237 = vmul.f32 %v236, 0.6931472
        %v238 = vlog2.pop %v231
        %v239 = vmul.f32 %v238, 0.6931472
        %v240 = vsub.f32 0.0, %v233
        %v241 = vsub.f32 0.0, %v235
        %v242 = vsub.f32 0.0, %v237
        %v243 = vsub.f32 0.0, %v239
        %v244 = vmax.f32 %v240, -9.2103405
        %v245 = vmax.f32 %v241, -9.2103405
        %v246 = vmax.f32 %v242, -9.2103405
        %v247 = vmax.f32 %v243, -9.2103405
        %v248 = vmin.f32 %v244, -0.000100005
        %v249 = vmin.f32 %v245, -0.000100005
        %v250 = vmin.f32 %v246, -0.000100005
        %v251 = vmin.f32 %v247, -0.000100005
        %v252 = vsub.f32 %v216, %v233
        %v253 = vsub.f32 %v217, %v235
        %v254 = vsub.f32 %v218, %v237
        %v255 = vsub.f32 %v219, %v239
        %v256 = vmax.f32 %v252, -9.2103405
        %v257 = vmax.f32 %v253, -9.2103405
        %v258 = vmax.f32 %v254, -9.2103405
        %v259 = vmax.f32 %v255, -9.2103405
        %v260 = vmin.f32 %v256, -0.000100005
        %v261 = vmin.f32 %v257, -0.000100005
        %v262 = vmin.f32 %v258, -0.000100005
        %v263 = vmin.f32 %v259, -0.000100005
        %v264 = vrcp.pop %v228
        %v265 = vrcp.pop %v229
        %v266 = vrcp.pop %v230
        %v267 = vrcp.pop %v231
        %v268 = vmax.f32 %v264, 0.0001
        %v269 = vmax.f32 %v265, 0.0001
        %v270 = vmax.f32 %v266, 0.0001
        %v271 = vmax.f32 %v267, 0.0001
        %v272 = vmin.f32 %v268, 0.9999
        %v273 = vmin.f32 %v269, 0.9999
        %v274 = vmin.f32 %v270, 0.9999
        %v275 = vmin.f32 %v271, 0.9999
        %vm276 = vcmp.eq.f32.partialorder %v204, 1.0
        %vm277 = vcmp.eq.f32.partialorder %v205, 1.0
        %vm278 = vcmp.eq.f32.partialorder %v206, 1.0
        %vm279 = vcmp.eq.f32.partialorder %v207, 1.0
        %v280 = vsel %vm276, 1, 0
        %v281 = vsel %vm277, 1, 0
        %v282 = vsel %vm278, 1, 0
        %v283 = vsel %vm279, 1, 0
        %v284 = vcvt.s32.f32 %v280
        %v285 = vcvt.s32.f32 %v281
        %v286 = vcvt.s32.f32 %v282
        %v287 = vcvt.s32.f32 %v283
        %v288 = vsub.f32 1.0, %v284
        %v289 = vsub.f32 1.0, %v285
        %v290 = vsub.f32 1.0, %v286
        %v291 = vsub.f32 1.0, %v287
        %v292 = vsub.f32 1.0, %v204
        %v293 = vsub.f32 1.0, %v205
        %v294 = vsub.f32 1.0, %v206
        %v295 = vsub.f32 1.0, %v207
        %v296 = vmul.f32 %v292, %v292
        %v297 = vmul.f32 %v293, %v293
        %v298 = vmul.f32 %v294, %v294
        %v299 = vmul.f32 %v295, %v295
        %v300 = vmul.f32 %v296, %v296
        %v301 = vmul.f32 %v297, %v297
        %v302 = vmul.f32 %v298, %v298
        %v303 = vmul.f32 %v299, %v299
        %v304 = vsub.f32 1.0, %v272
        %v305 = vsub.f32 1.0, %v273
        %v306 = vsub.f32 1.0, %v274
        %v307 = vsub.f32 1.0, %v275
        %v308 = vmul.f32 %v304, %v304
        %v309 = vmul.f32 %v305, %v305
        %v310 = vmul.f32 %v306, %v306
        %v311 = vmul.f32 %v307, %v307
        %v312 = vmul.f32 %v248, %v308
        %v313 = vmul.f32 %v249, %v309
        %v314 = vmul.f32 %v250, %v310
        %v315 = vmul.f32 %v251, %v311
        %v316 = vmul.f32 %v312, %v284
        %v317 = vmul.f32 %v313, %v285
        %v318 = vmul.f32 %v314, %v286
        %v319 = vmul.f32 %v315, %v287
        %v320 = vmul.f32 %v272, %v272
        %v321 = vmul.f32 %v273, %v273
        %v322 = vmul.f32 %v274, %v274
        %v323 = vmul.f32 %v275, %v275
        %v324 = vmul.f32 %v260, %v320
        %v325 = vmul.f32 %v261, %v321
        %v326 = vmul.f32 %v262, %v322
        %v327 = vmul.f32 %v263, %v323
        %v328 = vmul.f32 %v324, %v300
        %v329 = vmul.f32 %v325, %v301
        %v330 = vmul.f32 %v326, %v302
        %v331 = vmul.f32 %v327, %v303
        %v332 = vmul.f32 %v328, %v288
        %v333 = vmul.f32 %v329, %v289
        %v334 = vmul.f32 %v330, %v290
        %v335 = vmul.f32 %v331, %v291
        %v336 = vadd.f32 %v284, %v285
        %v337 = vadd.f32 %v336, %v286
        %v338 = vadd.f32 %v337, %v287
        %339 = vadd.xlane.f32.xlu0 %v338
        %v340 = vpop.xlane.xlu0 %339
        %v341 = vrot.slane %v340, 4
        %v342 = vadd.f32 %v340, %v341
        %v343 = vrot.slane %v342, 2
        %v344 = vadd.f32 %v342, %v343
        %v345 = vrot.slane %v344, 1
        %v346 = vadd.f32 %v344, %v345
        %s347 = vtos %v346
        %v348 = vstv %s347
        %v349 = vadd.f32 %v316, %v317
        %v350 = vadd.f32 %v349, %v318
        %v351 = vadd.f32 %v350, %v319
        %352 = vadd.xlane.f32.xlu0 %v351
        %v353 = vpop.xlane.xlu0 %352
        %v354 = vrot.slane %v353, 4
        %v355 = vadd.f32 %v353, %v354
        %v356 = vrot.slane %v355, 2
        %v357 = vadd.f32 %v355, %v356
        %v358 = vrot.slane %v357, 1
        %v359 = vadd.f32 %v357, %v358
        %s360 = vtos %v359
        %v361 = vstv %s360
        %v362 = vadd.f32 %v332, %v333
        %v363 = vadd.f32 %v362, %v334
        %v364 = vadd.f32 %v363, %v335
        %365 = vadd.xlane.f32.xlu0 %v364
        %v366 = vpop.xlane.xlu0 %365
        %v367 = vrot.slane %v366, 4
        %v368 = vadd.f32 %v366, %v367
        %v369 = vrot.slane %v368, 2
        %v370 = vadd.f32 %v368, %v369
        %v371 = vrot.slane %v370, 1
        %v372 = vadd.f32 %v370, %v371
        %s373 = vtos %v372
        %v374 = vstv %s373
        %vm375 = vcmp.gt.f32.partialorder %v348, 0.0
        %v376 = vadd.f32 %v361, %v374
        %v377 = vsub.f32 0.0, %v376
        %v378 = vmax.f32 %v348, 1.0
        %v379 = vrcp.pop %v378
        %v380 = vmul.f32 %v377, %v379
        %v381 = vsub.f32 0.0, %v374
        %v382 = vsel %vm375, %v380, %v381
        %vm383 = vcmask 0
        %384 = vst.msk [vmem:[%s199] sm:$0x1] %vm383, %v382
        %p385 = scmp.lt.s32.totalorder %s19, 1
        %s386 = scalar_select %p385, %s19, 1
        %s387 = scalar_lea.vmem %s2, %s386
        // Predicated region
        $region37: #{tpu_custom_call.1} parent=27 // pred_check
          %p388 = pneg %p89
        $region38: #{tpu_custom_call.1} parent=27 // pred_check_branch
          %390 = sbr.rel (%p388) target = $region40
        $region39: #{tpu_custom_call.1} parent=27 // pred_region
          _
        $region40: #{tpu_custom_call.1} parent=27 // pred_fallthru
          _
      $region28: #{tpu_custom_call.1} parent=5 // pred_fallthru
        _
      %p391 = scmp.le.s32.totalorder 2, %s14
      // Predicated region
      $region41: #{tpu_custom_call.1} parent=5 // pred_check
        %p392 = pneg %p391
      $region42: #{tpu_custom_call.1} parent=5 // pred_check_branch
        %394 = sbr.rel (%p392) target = $region44
      $region43: #{tpu_custom_call.1} parent=5 // pred_region
        %s395 = ssub.s32 %s14, 2
        // Predicated region
        $region45: #{tpu_custom_call.1} parent=43 // pred_check
          %p396 = pneg %p95
        $region46: #{tpu_custom_call.1} parent=43 // pred_check_branch
          %398 = sbr.rel (%p396) target = $region48
        $region47: #{tpu_custom_call.1} parent=43 // pred_region
          %p399 = scmp.lt.s32.totalorder %s20, 1
          %s400 = scalar_select %p399, %s20, 1
          %s401 = scalar_lea.vmem %s2, %s400
        $region48: #{tpu_custom_call.1} parent=43 // pred_fallthru
          _
      $region44: #{tpu_custom_call.1} parent=5 // pred_fallthru
        _
    $region6: #{tpu_custom_call.1} parent=1 // loop_footer
      %s18 = sadd.s32 1, %s14
    $region7: #{tpu_custom_call.1} parent=1 // loop_footer_branch
      %13 = sbr.rel target = $region3
    $region8: #{tpu_custom_call.1} parent=1 // loop_exit
      _
    %402 = vsyncpa [#allocation3], 1
    %s403 = scalar_lea.sflag [#allocation3], 1
    %404 = vsyncpa %s403, 1
    %405 = vsyncpa [#allocation5], 1
    %s406 = scalar_lea.sflag [#allocation5], 1
    %407 = vsyncpa %s406, 1

</llo_original>
